<compile_context>
chip_gen: v5e
topology: v5e:2x2
jax: 0.10.0
libtpu: 0.0.40
codegen_flags: <defaults>
</compile_context>

<pallas_src>
import functools
import math

import jax
import jax.numpy as jnp
from jax.experimental import pallas as pl
from jax.experimental.pallas import tpu as pltpu


_TARGET_BLOCK_BYTES = 2 * 1024 * 1024   # ~2 MiB per input block -> ~85%+ of HBM roofline
_VMEM_LIMIT_BYTES = 32 * 1024 * 1024    # explicit scoped-VMEM cap (safe v5e..v7x)


def _round_up(n: int, m: int) -> int:
    return (n + m - 1) // m * m


def _pick_tile(n_rows: int, d: int, itemsize: int, max_rows: int = 4096) -> int:
    """D-aware row tile: ~_TARGET_BLOCK_BYTES per block, multiple of 8 sublanes."""
    per_row = max(1, d * itemsize)
    tile = max(8, min(max_rows, _TARGET_BLOCK_BYTES // per_row))
    tile = max(8, (tile // 8) * 8)
    return min(tile, _round_up(n_rows, 8))


# ----------------------------- kernel bodies -------------------------------- #

def _rmsnorm_kernel(x_ref, w_ref, o_ref, *, eps):
    # x_ref: (TILE, D) rows; w_ref: (1, D) weight (constant index_map -> one DMA).
    x = x_ref[...].astype(jnp.float32)
    ms = jnp.mean(x * x, axis=-1, keepdims=True)           # (TILE, 1)
    inv = jax.lax.rsqrt(ms + eps)                           # EUP slot
    w = w_ref[...].astype(jnp.float32)                      # (1, D), broadcasts
    o_ref[...] = (x * inv * w).astype(o_ref.dtype)


def _residual_add_kernel(x_ref, y_ref, o_ref):
    # Eval-mode dropout is identity: fused residual add in the native dtype.
    o_ref[...] = (x_ref[...] + y_ref[...]).astype(o_ref.dtype)


def _hash_u32(x):
    # lowbias32 integer hash (Chris Wellons) -- pure VPU int ops, portable.
    x = x ^ (x >> jnp.uint32(16))
    x = x * jnp.uint32(0x7FEB352D)
    x = x ^ (x >> jnp.uint32(15))
    x = x * jnp.uint32(0x846CA68B)
    x = x ^ (x >> jnp.uint32(16))
    return x


def _residual_dropout_kernel(x_ref, y_ref, o_ref, *, threshold31, inv_keep, seed,
                             tile, d):
    # out = x + where(keep, y / (1 - rate), 0); keep mask from a stateless
    # counter hash of the global element index -> tiling-independent.
    x = x_ref[...].astype(jnp.float32)
    y = y_ref[...].astype(jnp.float32)

    row0 = pl.program_id(0) * tile                                   # int32 scalar
    rows = jax.lax.broadcasted_iota(jnp.int32, x.shape, 0) + row0
    cols = jax.lax.broadcasted_iota(jnp.int32, x.shape, 1)
    ctr = rows.astype(jnp.uint32) * jnp.uint32(d) + cols.astype(jnp.uint32)
    bits = _hash_u32(ctr ^ jnp.uint32(seed))
    # 31-bit signed compare against a precomputed integer threshold (no float cast).
    keep = (bits >> jnp.uint32(1)).astype(jnp.int32) >= jnp.int32(threshold31)

    dropped = jnp.where(keep, y * jnp.float32(inv_keep), 0.0)
    o_ref[...] = (x + dropped).astype(o_ref.dtype)


# ------------------------------- wrappers ------------------------------------ #

def rmsnorm(x: jax.Array, weight: jax.Array, *, eps: float = 1e-6,
            out_dtype=None) -> jax.Array:
    """Pallas RMSNorm over the last dim, row-tiled over all leading dims."""
    assert eps > 0.0
    orig_shape = x.shape
    D = orig_shape[-1]
    x2 = x.reshape(-1, D)
    N = x2.shape[0]
    out_dtype = x.dtype if out_dtype is None else out_dtype   # pass bf16 here to halve
                                                              # intermediate HBM traffic
    tile = _pick_tile(N, D, jnp.dtype(x2.dtype).itemsize)
    w2 = weight.reshape(1, D)

    out = pl.pallas_call(
        functools.partial(_rmsnorm_kernel, eps=float(eps)),
        out_shape=jax.ShapeDtypeStruct((N, D), out_dtype),
        grid_spec=pl.GridSpec(
            grid=(pl.cdiv(N, tile),),            # no pad: boundary block is masked
            in_specs=[
                pl.BlockSpec((tile, D), lambda i: (i, 0)),
                pl.BlockSpec((1, D), lambda i: (0, 0)),   # weight fetched once
            ],
            out_specs=pl.BlockSpec((tile, D), lambda i: (i, 0)),
        ),
        compiler_params=pltpu.CompilerParams(
            dimension_semantics=("parallel",),
            vmem_limit_bytes=_VMEM_LIMIT_BYTES),
    )(x2, w2)
    return out.reshape(orig_shape[:-1] + (D,))


def residual_dropout_add(x: jax.Array, y: jax.Array, *, rate: float = 0.0,
                         deterministic: bool = True, seed: int = 0) -> jax.Array:
    """Pallas kernel for x + inverted_dropout(y) (identity dropout in eval)."""
    assert 0.0 <= rate < 1.0, "dropout rate must be in [0, 1)"
    orig_shape = x.shape
    D = orig_shape[-1]
    x2 = x.reshape(-1, D)
    y2 = y.reshape(-1, D).astype(x.dtype)
    N = x2.shape[0]

    tile = _pick_tile(N, D, jnp.dtype(x2.dtype).itemsize)
    use_dropout = (not deterministic) and rate > 0.0

    if use_dropout:
        threshold31 = min(int(round(rate * (1 << 31))), (1 << 31) - 1)
        kernel = functools.partial(
            _residual_dropout_kernel,
            threshold31=threshold31,
            inv_keep=1.0 / (1.0 - rate),
            seed=int(seed) & 0xFFFFFFFF,
            tile=tile, d=D)
    else:
        kernel = _residual_add_kernel

    out = pl.pallas_call(
        kernel,
        out_shape=jax.ShapeDtypeStruct((N, D), x.dtype),
        grid_spec=pl.GridSpec(
            grid=(pl.cdiv(N, tile),),            # no pad: boundary block is masked
            in_specs=[
                pl.BlockSpec((tile, D), lambda i: (i, 0)),
                pl.BlockSpec((tile, D), lambda i: (i, 0)),
            ],
            out_specs=pl.BlockSpec((tile, D), lambda i: (i, 0)),
        ),
        input_output_aliases={0: 0},             # donate x's buffer to the result
        compiler_params=pltpu.CompilerParams(
            dimension_semantics=("parallel",),   # hash RNG is order-independent
            vmem_limit_bytes=_VMEM_LIMIT_BYTES),
    )(x2, y2)
    return out.reshape(orig_shape)


def sublayer_connection(x: jax.Array, sublayer, norm_weight: jax.Array, *,
                        eps: float = 1e-6, dropout_rate: float = 0.0,
                        deterministic: bool = True, rng_seed: int = 0,
                        norm_dtype=None) -> jax.Array:
    """JAX/Pallas equivalent of SublayerConnection.forward(x, sublayer)."""
    normed = rmsnorm(x, norm_weight, eps=eps, out_dtype=norm_dtype)
    # TODO(synk): `sublayer` is an arbitrary user-supplied callable; it runs as
    # plain JAX between the two Pallas kernels. When it is a plain linear/matmul,
    # the residual+dropout could instead be fused into a Pallas matmul epilogue
    # to remove one HBM round-trip of z.
    z = sublayer(normed)
    return residual_dropout_add(x, z, rate=dropout_rate,
                                deterministic=deterministic, seed=rng_seed)


# --------------------------------- demo -------------------------------------- #

if __name__ == "__main__":
    B, S, D = 2, 8, 128          # D = `size` of SublayerConnection
    eps = 1e-6
    dropout_rate = 0.1

    key = jax.random.PRNGKey(0)
    k_x, k_w, k_lin = jax.random.split(key, 3)

    x = jax.random.normal(k_x, (B, S, D), dtype=jnp.float32)
    norm_weight = (jnp.ones((D,), dtype=jnp.float32)
                   + 0.01 * jax.random.normal(k_w, (D,), dtype=jnp.float32))
    lin_w = jax.random.normal(k_lin, (D, D), dtype=jnp.float32) / math.sqrt(D)

    def sublayer(h):             # example sublayer: a plain-JAX linear map
        return jnp.dot(h, lin_w, precision=jax.lax.Precision.HIGHEST)

    # ---- eval-mode forward (dropout is identity) -> exact reference check ----
    out = sublayer_connection(x, sublayer, norm_weight, eps=eps,
                              dropout_rate=dropout_rate, deterministic=True)
    out = jax.block_until_ready(out)

    rms = jnp.sqrt(jnp.mean(x * x, axis=-1, keepdims=True) + eps)
    ref = x + sublayer(x / rms * norm_weight)
    assert out.shape == (B, S, D)
    assert jnp.allclose(out, ref, atol=2e-5, rtol=2e-5), \
        float(jnp.max(jnp.abs(out - ref)))

    # ---- train-mode forward (in-kernel stateless-hash inverted dropout) ----
    out_train = sublayer_connection(x, sublayer, norm_weight, eps=eps,
                                    dropout_rate=dropout_rate,
                                    deterministic=False, rng_seed=1234)
    out_train = jax.block_until_ready(out_train)
    assert out_train.shape == (B, S, D)
    assert bool(jnp.all(jnp.isfinite(out_train)))

    # Every element must be either the pure residual (dropped) or
    # x + z / (1 - rate) (kept), and the keep fraction must be ~0.9.
    z_ref = sublayer(rmsnorm(x, norm_weight, eps=eps))
    scale = 1.0 / (1.0 - dropout_rate)
    diff = out_train - x
    ok = (jnp.abs(diff) <= 1e-6) | (jnp.abs(diff - z_ref * scale) <= 1e-4)
    assert bool(jnp.all(ok))
    keep_frac = float(jnp.mean((jnp.abs(diff) > 1e-6).astype(jnp.float32)))
    assert 0.85 < keep_frac < 0.95, keep_frac

    print("KERNEL_OK")
</pallas_src>

<mosaic_0001>
module attributes {stable_mosaic.version = 11 : i64} {
  func.func @_rmsnorm_kernel(%arg0: i32, %arg1: memref<16x128xf32, #tpu.memory_space<vmem>>, %arg2: memref<1x128xf32, #tpu.memory_space<vmem>>, %arg3: memref<16x128xf32, #tpu.memory_space<vmem>>) attributes {dimension_semantics = [#tpu.dimension_semantics<parallel>], iteration_bounds = array<i64: 1>, scalar_prefetch = 0 : i64, scratch_operands = 0 : i64, tpu.core_type = #tpu.core_type<tc>, window_params = [{transform_indices = @transform_0, window_bounds = array<i64: 16, 128>}, {pipeline_mode = #tpu.pipeline_mode<synchronous>, transform_indices = @transform_1, window_bounds = array<i64: 1, 128>}, {transform_indices = @transform_2, window_bounds = array<i64: 16, 128>}]} {
    %c0 = arith.constant 0 : index
    %c0_0 = arith.constant 0 : index
    %0 = vector.load %arg1[%c0, %c0_0] : memref<16x128xf32, #tpu.memory_space<vmem>>, vector<16x128xf32>
    %1 = arith.mulf %0, %0 : vector<16x128xf32>
    %cst = arith.constant dense<0.000000e+00> : vector<16xf32>
    %2 = vector.multi_reduction <add>, %1, %cst [1] : vector<16x128xf32> to vector<16xf32>
    %3 = vector.shape_cast %2 : vector<16xf32> to vector<16x1xf32>
    %cst_1 = arith.constant 1.280000e+02 : f32
    %4 = vector.broadcast %cst_1 : f32 to vector<16x1xf32>
    %5 = arith.divf %3, %4 : vector<16x1xf32>
    %cst_2 = arith.constant 9.99999997E-7 : f32
    %6 = vector.broadcast %cst_2 : f32 to vector<16x1xf32>
    %7 = arith.addf %5, %6 : vector<16x1xf32>
    %8 = math.rsqrt %7 : vector<16x1xf32>
    %c0_3 = arith.constant 0 : index
    %c0_4 = arith.constant 0 : index
    %9 = vector.load %arg2[%c0_3, %c0_4] : memref<1x128xf32, #tpu.memory_space<vmem>>, vector<1x128xf32>
    %10 = vector.broadcast %8 : vector<16x1xf32> to vector<16x128xf32>
    %11 = arith.mulf %0, %10 : vector<16x128xf32>
    %12 = vector.broadcast %9 : vector<1x128xf32> to vector<16x128xf32>
    %13 = arith.mulf %11, %12 : vector<16x128xf32>
    %c0_5 = arith.constant 0 : index
    %c0_6 = arith.constant 0 : index
    %14 = vector.load %arg3[%c0_5, %c0_6] : memref<16x128xf32, #tpu.memory_space<vmem>>, vector<16x128xf32>
    tpu.vector_store %arg3[%c0_5, %c0_6], %13 {strides = array<i32>} : memref<16x128xf32, #tpu.memory_space<vmem>>, vector<16x128xf32>,
    return
  }
  func.func @transform_0(%arg0: i32) -> (i32, i32) {
    %c0_i32 = arith.constant 0 : i32
    %c0_i32_0 = arith.constant 0 : i32
    return %arg0, %c0_i32 : i32, i32
  }
  func.func @transform_1(%arg0: i32) -> (i32, i32) {
    %c0_i32 = arith.constant 0 : i32
    %c0_i32_0 = arith.constant 0 : i32
    %c0_i32_1 = arith.constant 0 : i32
    return %c0_i32, %c0_i32_0 : i32, i32
  }
  func.func @transform_2(%arg0: i32) -> (i32, i32) {
    %c0_i32 = arith.constant 0 : i32
    %c0_i32_0 = arith.constant 0 : i32
    return %arg0, %c0_i32 : i32, i32
  }
}

</mosaic_0001>

<llo_original>
// kernel: tpu_custom_call.1
$region0: #{tpu_custom_call.1}
  #allocation0 [shape = 'u32[]', space=smem, size = 0x4, offset = 0x4, fixed_abs, tag = 'smem constant byte address 0x4 - core index']
  #allocation1 [shape = 'u32[72,128]{1,0:T(1,128)}', space=vmem, size = 0x9000, scoped, tag = 'internal scratch']
  %s0 = inlined_call_operand.hbm [shape: f32[16,128], index: 0, kind: input, shape index: {}]
  %s1 = inlined_call_operand.hbm [shape: f32[1,128], index: 1, kind: input, shape index: {}]
  %s2 = inlined_call_operand.hbm [shape: f32[16,128], index: 2, kind: output, shape index: {}]
  %s3 = sld [smem:[#allocation0]]
  $region26: #{tpu_custom_call.1} parent=0
    _
  %s5 = ssub.s32 1, %s3
  %s6 = scalar_select 0, %s5, %s3
  $region1: #{tpu_custom_call.1} parent=0
    #allocation2 [shape = 'u8[8192]{0}', space=vmem, size = 0x2000, scoped, tag = 'input window, operand 0, single buffered']
    #allocation3 [shape = 's32[1]{0}', space=sflag, size = 0x4, scoped, tag = 'scoped memory for tpu_custom_call.1']
    #allocation4 [shape = 's32[1]{0}', space=sflag, size = 0x4, scoped, tag = 'scoped memory for tpu_custom_call.1']
    #allocation5 [shape = 'u8[512]{0}', space=vmem, size = 0x400, scoped, tag = 'input window, operand 1, single buffered']
    #allocation6 [shape = 's32[1]{0}', space=sflag, size = 0x4, scoped, tag = 'scoped memory for tpu_custom_call.1']
    #allocation7 [shape = 'u8[8192]{0}', space=vmem, size = 0x2000, scoped, tag = 'output window, operand 0, single buffered']
    %7 = vsyncpa [#allocation3], 0
    %8 = vsyncpa [#allocation6], 0
    %9 = vsyncpa [#allocation4], 0
    // Predicated region
    $region2: #{tpu_custom_call.1} parent=1 // pred_check
      _
    $region3: #{tpu_custom_call.1} parent=1 // pred_check_branch
      %11 = sbr.rel (0) target = $region5
    $region4: #{tpu_custom_call.1} parent=1 // pred_region
      %13 = vsyncadd [#allocation3], 0
      %s14 = sshll.u32 %s0, 4
      %s15 = int_to_ptr.hbm [resolvable:$true] %s14
      %s16 = sshll.u32 [#allocation2], 4
      %s17 = int_to_ptr.vmem [resolvable:$true] %s16
      %22 = dma.hbm_to_vmem [thread:$0]  %s15, 256, %s17, [#allocation3], 128, 128, 8
    $region5: #{tpu_custom_call.1} parent=1 // pred_fallthru
      _
    // Predicated region
    $region6: #{tpu_custom_call.1} parent=1 // pred_check
      _
    $region7: #{tpu_custom_call.1} parent=1 // pred_check_branch
      %24 = sbr.rel (0) target = $region9
    $region8: #{tpu_custom_call.1} parent=1 // pred_region
      %26 = vsyncadd [#allocation6], 0
      %s28 = sshll.u32 %s1, 4
      %s29 = int_to_ptr.hbm [resolvable:$true] %s28
      %s30 = sshll.u32 [#allocation5], 4
      %s31 = int_to_ptr.vmem [resolvable:$true] %s30
      %33 = dma.hbm_to_vmem [thread:$0]  %s29, 16, %s31, [#allocation6]
    $region9: #{tpu_custom_call.1} parent=1 // pred_fallthru
      _
    // Predicated region
    $region10: #{tpu_custom_call.1} parent=1 // pred_check
      _
    $region11: #{tpu_custom_call.1} parent=1 // pred_check_branch
      %35 = sbr.rel (0) target = $region13
    $region12: #{tpu_custom_call.1} parent=1 // pred_region
      %37 = dma.done [#allocation3], 256
    $region13: #{tpu_custom_call.1} parent=1 // pred_fallthru
      _
    // Predicated region
    $region14: #{tpu_custom_call.1} parent=1 // pred_check
      _
    $region15: #{tpu_custom_call.1} parent=1 // pred_check_branch
      %39 = sbr.rel (0) target = $region17
    $region16: #{tpu_custom_call.1} parent=1 // pred_region
      %41 = dma.done [#allocation6], 16
    $region17: #{tpu_custom_call.1} parent=1 // pred_fallthru
      _
    %v42 = vld [vmem:[#allocation2] sm:$0xff]
    %v43 = vld [vmem:[#allocation2 + $0x8] sm:$0xff]
    %v44 = vmul.f32 %v42, %v42
    %v45 = vmul.f32 %v43, %v43
    %46 = vadd.xlane.f32.xlu0 %v44
    %v47 = vpop.xlane.xlu0 %46
    %48 = vadd.xlane.f32.xlu0 %v45
    %v49 = vpop.xlane.xlu0 %48
    %v50 = vrcp.pop 128.0
    %v51 = vmul.f32 128.0, %v50
    %v52 = vsub.f32 1.0, %v51
    %v53 = vmul.f32 %v50, %v52
    %v54 = vadd.f32 %v50, %v53
    %vm55 = vweird.f32 %v50
    %v56 = vsel %vm55, %v50, %v54
    %v57 = vmul.f32 %v47, %v56
    %v58 = vmul.f32 %v49, %v56
    %v59 = vadd.f32 %v57, 1e-06
    %v60 = vadd.f32 %v58, 1e-06
    %v61 = vrsqrt.pop %v59
    %v62 = vmul.f32 %v61, %v59
    %v63 = vmul.f32 %v62, %v61
    %v64 = vmul.f32 0.5, %v63
    %v65 = vsub.f32 1.5, %v64
    %v66 = vmul.f32 %v61, %v65
    %vm67 = vweird.f32 %v59
    %vm68 = vweird.f32 %v61
    %vm69 = vmor %vm67, %vm68
    %v70 = vsel %vm69, %v61, %v66
    %v71 = vrsqrt.pop %v60
    %v72 = vmul.f32 %v71, %v60
    %v73 = vmul.f32 %v72, %v71
    %v74 = vmul.f32 0.5, %v73
    %v75 = vsub.f32 1.5, %v74
    %v76 = vmul.f32 %v71, %v75
    %vm77 = vweird.f32 %v60
    %vm78 = vweird.f32 %v71
    %vm79 = vmor %vm77, %vm78
    %v80 = vsel %vm79, %v71, %v76
    %v81 = vld [vmem:[#allocation5] sm:$0x1]
    %v82 = vmul.f32 %v42, %v70
    %v83 = vmul.f32 %v43, %v80
    %v85 = vperm.slane %v81, 0
    %v87 = vmul.f32 %v82, %v85
    %v88 = vmul.f32 %v83, %v85
    %89 = vst [vmem:[#allocation7] sm:$0xff] %v87
    %90 = vst [vmem:[#allocation7 + $0x8] sm:$0xff] %v88
    // Predicated region
    $region18: #{tpu_custom_call.1} parent=1 // pred_check
      _
    $region19: #{tpu_custom_call.1} parent=1 // pred_check_branch
      %92 = sbr.rel (0) target = $region21
    $region20: #{tpu_custom_call.1} parent=1 // pred_region
      %94 = vsyncadd [#allocation4], 0
      %s95 = sshll.u32 [#allocation7], 4
      %s96 = int_to_ptr.vmem [resolvable:$true] %s95
      %s97 = sshll.u32 %s2, 4
      %s98 = int_to_ptr.hbm [resolvable:$true] %s97
      %103 = dma.vmem_to_hbm [thread:$0]  %s96, 256, %s98, [#allocation4], 128, 128, 8
    $region21: #{tpu_custom_call.1} parent=1 // pred_fallthru
      _
    // Predicated region
    $region22: #{tpu_custom_call.1} parent=1 // pred_check
      _
    $region23: #{tpu_custom_call.1} parent=1 // pred_check_branch
      %105 = sbr.rel (0) target = $region25
    $region24: #{tpu_custom_call.1} parent=1 // pred_region
      %107 = dma.done [#allocation4], 256
    $region25: #{tpu_custom_call.1} parent=1 // pred_fallthru
      _
    %108 = vsyncpa [#allocation3], 1
    %109 = vsyncpa [#allocation6], 1
    %110 = vsyncpa [#allocation4], 1

</llo_original>
